<compile_context>
chip_gen: v5e
topology: v5e:2x2
jax: 0.10.0
libtpu: 0.0.40
codegen_flags: <defaults>
</compile_context>

<pallas_src>
import math
import functools

import jax
import jax.numpy as jnp
from jax.experimental import pallas as pl
from jax.experimental.pallas import tpu as pltpu

LANE = 128
SUBLANE = 8


def _round_up(x, m):
    return (x + m - 1) // m * m


# ----------------------------------------------------------------------------
# One-time, generation-aware hardware probe.
# ----------------------------------------------------------------------------
@functools.lru_cache(maxsize=1)
def _tpu_config():
    """Returns (usable_vmem_bytes_per_core, num_tensorcores_sharing_the_grid)."""
    kind = jax.devices()[0].device_kind.lower()
    if "v7" in kind:
        capacity, two_core = 64 * 2**20, True      # 64 MiB per TensorCore
    elif "v2" in kind or "v3" in kind:
        capacity, two_core = 16 * 2**20, True
    elif "v4" in kind or "v5p" in kind:
        capacity, two_core = 128 * 2**20, True
    else:                                          # v5e / v6e / unknown
        capacity, two_core = 128 * 2**20, False
    # Optional refinement from the runtime; this narrow guard only covers the
    # hardware query, never the kernel itself.
    try:
        reported = int(pltpu.get_tpu_info().vmem_capacity_bytes)
        if reported > 0:
            capacity = min(capacity, reported)
    except Exception:
        pass
    headroom = max(8 * 2**20, capacity // 8)       # leave scoped-VMEM headroom
    return capacity - headroom, (2 if two_core else 1)


# ----------------------------------------------------------------------------
# Kernel: fused 3-layer MLP on a (block_m, D) tile of the batch.
# ----------------------------------------------------------------------------
def mlp_kernel(x_ref, w1_ref, b1_ref, w2_ref, b2_ref, w3_ref, b3_ref, o_ref):
    # x stays in its HBM dtype; cast to the MXU compute dtype after the VMEM
    # load so the wrapper never needs a separate cast pass over x.
    x = x_ref[...].astype(w1_ref.dtype)

    # Hidden layer 1: linear (MXU, f32 acc) + bias + relu.
    h = jnp.dot(x, w1_ref[...], preferred_element_type=jnp.float32) + b1_ref[...]
    h = jnp.maximum(h, 0.0).astype(w2_ref.dtype)

    # Hidden layer 2: linear + bias + relu.  (Dropout = identity at inference.)
    h = jnp.dot(h, w2_ref[...], preferred_element_type=jnp.float32) + b2_ref[...]
    h = jnp.maximum(h, 0.0).astype(w3_ref.dtype)

    # Final layer: linear, no activation.
    y = jnp.dot(h, w3_ref[...], preferred_element_type=jnp.float32) + b3_ref[...]
    o_ref[...] = y.astype(o_ref.dtype)


# ----------------------------------------------------------------------------
# pallas_call wrapper
# ----------------------------------------------------------------------------
@functools.partial(jax.jit, static_argnames=("block_m", "vmem_limit"))
def _mlp_pallas(x, w1, b1, w2, b2, w3, b3, *, block_m, vmem_limit):
    Bp, D = x.shape
    H1, H2, N = w1.shape[1], w2.shape[1], w3.shape[1]
    grid = (Bp // block_m,)

    def rep(a):
        nd = a.ndim
        return pl.BlockSpec(a.shape, lambda i, nd=nd: (0,) * nd)

    weight_bytes = sum(int(a.size) * a.dtype.itemsize for a in (w1, b1, w2, b2, w3, b3))
    flops = 2 * Bp * (D * H1 + H1 * H2 + H2 * N)
    bytes_accessed = int(x.size) * x.dtype.itemsize + weight_bytes + Bp * N * 4

    return pl.pallas_call(
        mlp_kernel,
        out_shape=jax.ShapeDtypeStruct((Bp, N), jnp.float32),
        grid_spec=pltpu.PrefetchScalarGridSpec(
            num_scalar_prefetch=0,
            grid=grid,
            in_specs=[
                pl.BlockSpec((block_m, D), lambda i: (i, 0)),   # x batch tile
                rep(w1), rep(b1), rep(w2), rep(b2), rep(w3), rep(b3),
            ],
            out_specs=pl.BlockSpec((block_m, N), lambda i: (i, 0)),
        ),
        compiler_params=pltpu.CompilerParams(
            dimension_semantics=("parallel",),
            vmem_limit_bytes=int(vmem_limit),
        ),
        cost_estimate=pl.CostEstimate(
            flops=int(flops), transcendentals=0, bytes_accessed=int(bytes_accessed)),
    )(x, w1, b1, w2, b2, w3, b3)


def _choose_block_m(B, D, H1p, H2p, out_dim, in_itemsize, weight_bytes, usable_vmem):
    """Largest batch tile fitting usable VMEM after charging the resident
    weights and the per-row intermediates; multiple of 8, <=512 rows."""
    # Resident cost independent of block_m: replicated weights/biases keep two
    # pipeline buffers allocated (fetched once, constant block index), plus a
    # small internal-scratch margin.
    # TODO(synk): if 2*weight_bytes alone exceeds usable_vmem (very wide hidden
    # layers), a hidden-dim-tiled variant with a grid reduction axis is needed.
    avail = usable_vmem - 2 * weight_bytes - 4 * 2**20
    # Per-batch-row cost: double-buffered input tile, double-buffered f32
    # output tile, and the (block_m, H) intermediates (f32 pre-activation +
    # compute-dtype post-activation per hidden layer) that spill to VMEM.
    per_row = (2 * D * in_itemsize
               + 2 * out_dim * 4
               + 6 * (H1p + H2p))
    bm = avail // max(per_row, 1)
    # 256-512 row tiles already sit near the HBM roofline; bigger only adds
    # vreg-spill / store-slot pressure.
    bm = min(bm, 512, _round_up(B, SUBLANE))
    bm = max(SUBLANE, (bm // SUBLANE) * SUBLANE)
    return int(bm)


def _pad2(a, rows, cols):
    pr, pc = rows - a.shape[0], cols - a.shape[1]
    if pr == 0 and pc == 0:
        return a
    return jnp.pad(a, ((0, pr), (0, pc)))


def mlp_forward(x, params, *, block_m=None, compute_dtype=jnp.bfloat16):
    """Inference forward of MLP(num_hidden_lyr=2, act='relu', bn=False).

    compute_dtype selects the MXU input precision (bfloat16 = fast path,
    float32 = PyTorch-matching numerics); accumulation/output stay float32.
    """
    (w1, b1), (w2, b2), (w3, b3) = params
    B, D = x.shape
    out_dim = w3.shape[1]
    H1, H2 = w1.shape[1], w2.shape[1]
    H1p, H2p = _round_up(H1, LANE), _round_up(H2, LANE)

    usable_vmem, num_cores = _tpu_config()
    cd = compute_dtype

    # Lane-pad the hidden widths on the weight side only (zero rows/cols are
    # exact no-ops through relu + the following matmul).  The contraction dim
    # of layer 1 stays at D so x never needs a wrapper-side pad/cast pass.
    w1p = _pad2(w1.astype(cd), D, H1p)
    b1p = _pad2(b1.astype(jnp.float32), 1, H1p)
    w2p = _pad2(w2.astype(cd), H1p, H2p)
    b2p = _pad2(b2.astype(jnp.float32), 1, H2p)
    w3p = _pad2(w3.astype(cd), H2p, out_dim)      # output columns NOT padded
    b3p = b3.astype(jnp.float32)

    weights = (w1p, b1p, w2p, b2p, w3p, b3p)
    weight_bytes = sum(int(a.size) * a.dtype.itemsize for a in weights)

    if block_m is None:
        block_m = _choose_block_m(B, D, H1p, H2p, out_dim,
                                  x.dtype.itemsize, weight_bytes, usable_vmem)

    # Grid-step count.  Single-TC parts (v5e/v6e): the grid is a serial loop,
    # so never split a batch that fits one tile.  Two-TC parts (v7x megacore):
    # "parallel" shards the batch axis across cores, so force an even number
    # of steps for balance.
    steps = int(pl.cdiv(B, block_m))
    if num_cores >= 2 and B >= 2 * SUBLANE and steps % 2 == 1:
        steps += 1
        block_m = max(SUBLANE, _round_up(int(pl.cdiv(B, steps)), SUBLANE))
    Bp = steps * block_m

    x_in = x
    if Bp != B:
        x_in = jnp.pad(x_in, ((0, Bp - B), (0, 0)))

    y = _mlp_pallas(x_in, *weights,
                    block_m=int(block_m), vmem_limit=int(usable_vmem))
    return y[:B, :out_dim].astype(x.dtype)


# ----------------------------------------------------------------------------
# Parameter init (matches MLP.weight_init: xavier_uniform with relu gain for
# hidden layers, linear gain for the final layer; PyTorch-style bias init).
# ----------------------------------------------------------------------------
def xavier_uniform(key, fan_in, fan_out, gain):
    a = gain * math.sqrt(6.0 / (fan_in + fan_out))
    return jax.random.uniform(key, (fan_in, fan_out), jnp.float32, -a, a)


def init_mlp_params(key, input_dim, output_dim, num_hidden_lyr=2):
    layer_channels = [input_dim] + [input_dim] * num_hidden_lyr + [output_dim]
    relu_gain = math.sqrt(2.0)   # nn.init.calculate_gain('relu')
    lin_gain = 1.0               # nn.init.calculate_gain('linear')
    params = []
    keys = jax.random.split(key, 2 * (len(layer_channels) - 1))
    for i in range(len(layer_channels) - 1):
        fan_in, fan_out = layer_channels[i], layer_channels[i + 1]
        gain = lin_gain if i == len(layer_channels) - 2 else relu_gain
        w = xavier_uniform(keys[2 * i], fan_in, fan_out, gain)
        bound = 1.0 / math.sqrt(fan_in)                      # torch Linear bias init
        b = jax.random.uniform(keys[2 * i + 1], (1, fan_out), jnp.float32, -bound, bound)
        params.append((w, b))
    return params


def reference_mlp(x, params, compute_dtype=jnp.float32):
    """Pure-JAX reference. compute_dtype=bfloat16 mirrors the kernel's MXU path."""
    (w1, b1), (w2, b2), (w3, b3) = params
    c = lambda a: a.astype(compute_dtype)
    h = jnp.maximum(jnp.dot(c(x), c(w1), preferred_element_type=jnp.float32) + b1, 0.0)
    h = jnp.maximum(jnp.dot(c(h), c(w2), preferred_element_type=jnp.float32) + b2, 0.0)
    return jnp.dot(c(h), c(w3), preferred_element_type=jnp.float32) + b3


if __name__ == "__main__":
    key = jax.random.PRNGKey(0)
    k_x, k_p, k_x2 = jax.random.split(key, 3)

    batch, input_dim, output_dim = 8, 32, 16
    x = jax.random.normal(k_x, (batch, input_dim), jnp.float32)
    params = init_mlp_params(k_p, input_dim, output_dim, num_hidden_lyr=2)

    # bf16 fast path.
    y = jax.block_until_ready(mlp_forward(x, params))
    assert y.shape == (batch, output_dim)
    y_ref_bf = reference_mlp(x, params, compute_dtype=jnp.bfloat16)  # MXU-matched
    y_ref_32 = reference_mlp(x, params, compute_dtype=jnp.float32)   # module semantics
    assert jnp.allclose(y, y_ref_bf, atol=5e-3, rtol=5e-3)
    assert jnp.allclose(y, y_ref_32, atol=1e-1, rtol=1e-1)

    # f32 path (PyTorch-matching numerics).
    y32 = jax.block_until_ready(mlp_forward(x, params, compute_dtype=jnp.float32))
    assert jnp.allclose(y32, y_ref_32, atol=5e-3, rtol=5e-3)

    # Ragged batch -> exercises batch padding / multi-step (even on v7x) grid.
    batch2 = 20
    x2 = jax.random.normal(k_x2, (batch2, input_dim), jnp.float32)
    y2 = jax.block_until_ready(mlp_forward(x2, params))
    assert y2.shape == (batch2, output_dim)
    assert jnp.allclose(y2, reference_mlp(x2, params, jnp.bfloat16), atol=5e-3, rtol=5e-3)
    assert jnp.allclose(y2, reference_mlp(x2, params, jnp.float32), atol=1e-1, rtol=1e-1)

    # TODO(synk): train-mode dropout, the optional bn=True BatchNorm branch and
    # return_layer_outs=True are not implemented; eval-mode semantics only.
    print("KERNEL_OK")
</pallas_src>

<mosaic_0001>
module attributes {stable_mosaic.version = 11 : i64} {
  func.func @mlp_kernel(%arg0: i32, %arg1: memref<8x32xf32, #tpu.memory_space<vmem>>, %arg2: memref<32x128xbf16, #tpu.memory_space<vmem>>, %arg3: memref<1x128xf32, #tpu.memory_space<vmem>>, %arg4: memref<128x128xbf16, #tpu.memory_space<vmem>>, %arg5: memref<1x128xf32, #tpu.memory_space<vmem>>, %arg6: memref<128x16xbf16, #tpu.memory_space<vmem>>, %arg7: memref<1x16xf32, #tpu.memory_space<vmem>>, %arg8: memref<8x16xf32, #tpu.memory_space<vmem>>) attributes {dimension_semantics = [#tpu.dimension_semantics<parallel>], iteration_bounds = array<i64: 1>, scalar_prefetch = 0 : i64, scratch_operands = 0 : i64, tpu.core_type = #tpu.core_type<tc>, window_params = [{transform_indices = @transform_0, window_bounds = array<i64: 8, 32>}, {pipeline_mode = #tpu.pipeline_mode<synchronous>, transform_indices = @transform_1, window_bounds = array<i64: 32, 128>}, {pipeline_mode = #tpu.pipeline_mode<synchronous>, transform_indices = @transform_2, window_bounds = array<i64: 1, 128>}, {pipeline_mode = #tpu.pipeline_mode<synchronous>, transform_indices = @transform_3, window_bounds = array<i64: 128, 128>}, {pipeline_mode = #tpu.pipeline_mode<synchronous>, transform_indices = @transform_4, window_bounds = array<i64: 1, 128>}, {pipeline_mode = #tpu.pipeline_mode<synchronous>, transform_indices = @transform_5, window_bounds = array<i64: 128, 16>}, {pipeline_mode = #tpu.pipeline_mode<synchronous>, transform_indices = @transform_6, window_bounds = array<i64: 1, 16>}, {transform_indices = @transform_7, window_bounds = array<i64: 8, 16>}]} {
    %c0 = arith.constant 0 : index
    %c0_0 = arith.constant 0 : index
    %0 = vector.load %arg1[%c0, %c0_0] : memref<8x32xf32, #tpu.memory_space<vmem>>, vector<8x32xf32>
    %1 = arith.truncf %0 : vector<8x32xf32> to vector<8x32xbf16>
    %c0_1 = arith.constant 0 : index
    %c0_2 = arith.constant 0 : index
    %2 = vector.load %arg2[%c0_1, %c0_2] : memref<32x128xbf16, #tpu.memory_space<vmem>>, vector<32x128xbf16>
    %cst = arith.constant dense<0.000000e+00> : vector<8x128xf32>
    %3 = tpu.matmul %1, %2, %cst {dimension_numbers = #tpu.dot_dimension_numbers<[1], [0], [0], [1], [0, 0, 1, 1], [], []>} : vector<8x32xbf16>, vector<32x128xbf16>, vector<8x128xf32> -> vector<8x128xf32>
    %c0_3 = arith.constant 0 : index
    %c0_4 = arith.constant 0 : index
    %4 = vector.load %arg3[%c0_3, %c0_4] : memref<1x128xf32, #tpu.memory_space<vmem>>, vector<1x128xf32>
    %5 = vector.broadcast %4 : vector<1x128xf32> to vector<8x128xf32>
    %6 = arith.addf %3, %5 : vector<8x128xf32>
    %cst_5 = arith.constant 0.000000e+00 : f32
    %7 = vector.broadcast %cst_5 : f32 to vector<8x128xf32>
    %8 = arith.maximumf %6, %7 : vector<8x128xf32>
    %9 = arith.truncf %8 : vector<8x128xf32> to vector<8x128xbf16>
    %c0_6 = arith.constant 0 : index
    %c0_7 = arith.constant 0 : index
    %10 = vector.load %arg4[%c0_6, %c0_7] : memref<128x128xbf16, #tpu.memory_space<vmem>>, vector<128x128xbf16>
    %cst_8 = arith.constant dense<0.000000e+00> : vector<8x128xf32>
    %11 = tpu.matmul %9, %10, %cst_8 {dimension_numbers = #tpu.dot_dimension_numbers<[1], [0], [0], [1], [0, 0, 1, 1], [], []>} : vector<8x128xbf16>, vector<128x128xbf16>, vector<8x128xf32> -> vector<8x128xf32>
    %c0_9 = arith.constant 0 : index
    %c0_10 = arith.constant 0 : index
    %12 = vector.load %arg5[%c0_9, %c0_10] : memref<1x128xf32, #tpu.memory_space<vmem>>, vector<1x128xf32>
    %13 = vector.broadcast %12 : vector<1x128xf32> to vector<8x128xf32>
    %14 = arith.addf %11, %13 : vector<8x128xf32>
    %cst_11 = arith.constant 0.000000e+00 : f32
    %15 = vector.broadcast %cst_11 : f32 to vector<8x128xf32>
    %16 = arith.maximumf %14, %15 : vector<8x128xf32>
    %17 = arith.truncf %16 : vector<8x128xf32> to vector<8x128xbf16>
    %c0_12 = arith.constant 0 : index
    %c0_13 = arith.constant 0 : index
    %18 = vector.load %arg6[%c0_12, %c0_13] : memref<128x16xbf16, #tpu.memory_space<vmem>>, vector<128x16xbf16>
    %cst_14 = arith.constant dense<0.000000e+00> : vector<8x16xf32>
    %19 = tpu.matmul %17, %18, %cst_14 {dimension_numbers = #tpu.dot_dimension_numbers<[1], [0], [0], [1], [0, 0, 1, 1], [], []>} : vector<8x128xbf16>, vector<128x16xbf16>, vector<8x16xf32> -> vector<8x16xf32>
    %c0_15 = arith.constant 0 : index
    %c0_16 = arith.constant 0 : index
    %20 = vector.load %arg7[%c0_15, %c0_16] : memref<1x16xf32, #tpu.memory_space<vmem>>, vector<1x16xf32>
    %21 = vector.broadcast %20 : vector<1x16xf32> to vector<8x16xf32>
    %22 = arith.addf %19, %21 : vector<8x16xf32>
    %c0_17 = arith.constant 0 : index
    %c0_18 = arith.constant 0 : index
    %23 = vector.load %arg8[%c0_17, %c0_18] : memref<8x16xf32, #tpu.memory_space<vmem>>, vector<8x16xf32>
    tpu.vector_store %arg8[%c0_17, %c0_18], %22 {strides = array<i32>} : memref<8x16xf32, #tpu.memory_space<vmem>>, vector<8x16xf32>,
    return
  }
  func.func @transform_0(%arg0: i32) -> (i32, i32) {
    %c0_i32 = arith.constant 0 : i32
    %c0_i32_0 = arith.constant 0 : i32
    return %arg0, %c0_i32 : i32, i32
  }
  func.func @transform_1(%arg0: i32) -> (i32, i32) {
    %c0_i32 = arith.constant 0 : i32
    %c0_i32_0 = arith.constant 0 : i32
    %c0_i32_1 = arith.constant 0 : i32
    return %c0_i32, %c0_i32_0 : i32, i32
  }
  func.func @transform_2(%arg0: i32) -> (i32, i32) {
    %c0_i32 = arith.constant 0 : i32
    %c0_i32_0 = arith.constant 0 : i32
    %c0_i32_1 = arith.constant 0 : i32
    return %c0_i32, %c0_i32_0 : i32, i32
  }
  func.func @transform_3(%arg0: i32) -> (i32, i32) {
    %c0_i32 = arith.constant 0 : i32
    %c0_i32_0 = arith.constant 0 : i32
    %c0_i32_1 = arith.constant 0 : i32
    return %c0_i32, %c0_i32_0 : i32, i32
  }
  func.func @transform_4(%arg0: i32) -> (i32, i32) {
    %c0_i32 = arith.constant 0 : i32
    %c0_i32_0 = arith.constant 0 : i32
    %c0_i32_1 = arith.constant 0 : i32
    return %c0_i32, %c0_i32_0 : i32, i32
  }
  func.func @transform_5(%arg0: i32) -> (i32, i32) {
    %c0_i32 = arith.constant 0 : i32
    %c0_i32_0 = arith.constant 0 : i32
    %c0_i32_1 = arith.constant 0 : i32
    return %c0_i32, %c0_i32_0 : i32, i32
  }
  func.func @transform_6(%arg0: i32) -> (i32, i32) {
    %c0_i32 = arith.constant 0 : i32
    %c0_i32_0 = arith.constant 0 : i32
    %c0_i32_1 = arith.constant 0 : i32
    return %c0_i32, %c0_i32_0 : i32, i32
  }
  func.func @transform_7(%arg0: i32) -> (i32, i32) {
    %c0_i32 = arith.constant 0 : i32
    %c0_i32_0 = arith.constant 0 : i32
    return %arg0, %c0_i32 : i32, i32
  }
}

</mosaic_0001>

<llo_original>
// kernel: _mlp_pallas.1
$region0: #{_mlp_pallas.1}
  #allocation0 [shape = 'u32[]', space=smem, size = 0x4, offset = 0x4, fixed_abs, tag = 'smem constant byte address 0x4 - core index']
  #allocation1 [shape = 'u32[72,128]{1,0:T(1,128)}', space=vmem, size = 0x9000, scoped, tag = 'internal scratch']
  %s0 = inlined_call_operand.vmem [shape: f32[8,32], index: 0, kind: input, shape index: {}]
  %s1 = inlined_call_operand.hbm [shape: bf16[32,128], index: 1, kind: input, shape index: {}]
  %s2 = inlined_call_operand.vmem [shape: f32[1,128], index: 2, kind: input, shape index: {}]
  %s3 = inlined_call_operand.vmem [shape: bf16[128,128], index: 3, kind: input, shape index: {}]
  %s4 = inlined_call_operand.vmem [shape: f32[1,128], index: 4, kind: input, shape index: {}]
  %s5 = inlined_call_operand.vmem [shape: bf16[128,16], index: 5, kind: input, shape index: {}]
  %s6 = inlined_call_operand.vmem [shape: f32[1,16], index: 6, kind: input, shape index: {}]
  %s7 = inlined_call_operand.hbm [shape: f32[8,16], index: 7, kind: output, shape index: {}]
  %s8 = sld [smem:[#allocation0]]
  $region42: #{_mlp_pallas.1} parent=0
    _
  %s10 = ssub.s32 1, %s8
  %s11 = scalar_select 0, %s10, %s8
  $region1: #{_mlp_pallas.1} parent=0
    #allocation2 [shape = 'u8[8192]{0}', space=vmem, size = 0x2000, scoped, tag = 'input window, operand 1, single buffered']
    #allocation3 [shape = 's32[1]{0}', space=sflag, size = 0x4, scoped, tag = 'scoped memory for _mlp_pallas.1']
    #allocation4 [shape = 's32[1]{0}', space=sflag, size = 0x4, scoped, tag = 'scoped memory for _mlp_pallas.1']
    #allocation5 [shape = 'u8[4096]{0}', space=vmem, size = 0x1000, scoped, tag = 'output window, operand 0, single buffered']
    %12 = vsyncpa [#allocation3], 0
    %13 = vsyncpa [#allocation4], 0
    // Predicated region
    $region2: #{_mlp_pallas.1} parent=1 // pred_check
      _
    $region3: #{_mlp_pallas.1} parent=1 // pred_check_branch
      %15 = sbr.rel (0) target = $region5
    $region4: #{_mlp_pallas.1} parent=1 // pred_region
      _
    $region5: #{_mlp_pallas.1} parent=1 // pred_fallthru
      _
    // Predicated region
    $region6: #{_mlp_pallas.1} parent=1 // pred_check
      _
    $region7: #{_mlp_pallas.1} parent=1 // pred_check_branch
      %17 = sbr.rel (0) target = $region9
    $region8: #{_mlp_pallas.1} parent=1 // pred_region
      %19 = vsyncadd [#allocation3], 0
      %s20 = sshll.u32 %s1, 4
      %s21 = int_to_ptr.hbm [resolvable:$true] %s20
      %s22 = sshll.u32 [#allocation2], 4
      %s23 = int_to_ptr.vmem [resolvable:$true] %s22
      %28 = dma.hbm_to_vmem [thread:$0]  %s21, 256, %s23, [#allocation3], 64, 64, 4
    $region9: #{_mlp_pallas.1} parent=1 // pred_fallthru
      _
    // Predicated region
    $region10: #{_mlp_pallas.1} parent=1 // pred_check
      _
    $region11: #{_mlp_pallas.1} parent=1 // pred_check_branch
      %30 = sbr.rel (0) target = $region13
    $region12: #{_mlp_pallas.1} parent=1 // pred_region
      _
    $region13: #{_mlp_pallas.1} parent=1 // pred_fallthru
      _
    // Predicated region
    $region14: #{_mlp_pallas.1} parent=1 // pred_check
      _
    $region15: #{_mlp_pallas.1} parent=1 // pred_check_branch
      %32 = sbr.rel (0) target = $region17
    $region16: #{_mlp_pallas.1} parent=1 // pred_region
      _
    $region17: #{_mlp_pallas.1} parent=1 // pred_fallthru
      _
    // Predicated region
    $region18: #{_mlp_pallas.1} parent=1 // pred_check
      _
    $region19: #{_mlp_pallas.1} parent=1 // pred_check_branch
      %34 = sbr.rel (0) target = $region21
    $region20: #{_mlp_pallas.1} parent=1 // pred_region
      _
    $region21: #{_mlp_pallas.1} parent=1 // pred_fallthru
      _
    // Predicated region
    $region22: #{_mlp_pallas.1} parent=1 // pred_check
      _
    $region23: #{_mlp_pallas.1} parent=1 // pred_check_branch
      %36 = sbr.rel (0) target = $region25
    $region24: #{_mlp_pallas.1} parent=1 // pred_region
      _
    $region25: #{_mlp_pallas.1} parent=1 // pred_fallthru
      _
    // Predicated region
    $region26: #{_mlp_pallas.1} parent=1 // pred_check
      _
    $region27: #{_mlp_pallas.1} parent=1 // pred_check_branch
      %38 = sbr.rel (0) target = $region29
    $region28: #{_mlp_pallas.1} parent=1 // pred_region
      _
    $region29: #{_mlp_pallas.1} parent=1 // pred_fallthru
      _
    // Predicated region
    $region30: #{_mlp_pallas.1} parent=1 // pred_check
      _
    $region31: #{_mlp_pallas.1} parent=1 // pred_check_branch
      %40 = sbr.rel (0) target = $region33
    $region32: #{_mlp_pallas.1} parent=1 // pred_region
      %42 = dma.done [#allocation3], 256
    $region33: #{_mlp_pallas.1} parent=1 // pred_fallthru
      _
    %v44 = vld [vmem:[%s0] sm:$0xff]
    %v45 = vpack.c.bf16 %v44, %v44
    %v46 = vld [vmem:[#allocation2] sm:$0xf]
    %v47 = vld [vmem:[#allocation2 + $0x4] sm:$0xf]
    %v48 = vld [vmem:[#allocation2 + $0x8] sm:$0xf]
    %v49 = vld [vmem:[#allocation2 + $0xc] sm:$0xf]
    %v50 = vld [vmem:[%s2] sm:$0x1]
    %v52 = vperm.slane %v50, 0
    %v58 = vunpack.c.l.b16 %v46
    %v59 = vunpack.c.l.b16 %v47
    %v60 = vunpack.c.l.b16 %v48
    %v61 = vunpack.c.l.b16 %v49
    %v62 = vpack.c.b16 %v59, %v58
    %v63 = vpack.c.b16 %v61, %v60
    %vm66 = vcmask 261120
    %v68 = vsel %vm66, %v45, 0
    %70 = vmatpush.bf16.msra.mxu0 0
    %71 = vmatpush.bf16.msra.mxu0 0
    %72 = vmatpush.bf16.msra.mxu0 0
    %73 = vmatpush.bf16.msra.mxu0 0
    %74 = vmatpush.bf16.msra.mxu0 0
    %75 = vmatpush.bf16.msra.mxu0 0
    %76 = vmatpush.bf16.msra.mxu0 %v63
    %77 = vmatpush.bf16.msra.mxu0 %v62
    %78 = vmatmul.bf16.gmra.mxu0 %v68
    %v79 = vpop.f32.mrf.mxu0
    %v80 = vadd.f32 %v52, %v79
    %v81 = vpop.f32.mrf.mxu0
    %82 = vdwg.mxu0
    %v83 = vmax.f32 %v80, 0.0
    %v84 = vpack.c.bf16 %v83, %v83
    %v85 = vld [vmem:[%s3] sm:$0xf]
    %v86 = vld [vmem:[%s3 + $0x4] sm:$0xf]
    %v87 = vld [vmem:[%s3 + $0x8] sm:$0xf]
    %v88 = vld [vmem:[%s3 + $0xc] sm:$0xf]
    %v89 = vld [vmem:[%s3 + $0x10] sm:$0xf]
    %v90 = vld [vmem:[%s3 + $0x14] sm:$0xf]
    %v91 = vld [vmem:[%s3 + $0x18] sm:$0xf]
    %v92 = vld [vmem:[%s3 + $0x1c] sm:$0xf]
    %v93 = vld [vmem:[%s3 + $0x20] sm:$0xf]
    %v94 = vld [vmem:[%s3 + $0x24] sm:$0xf]
    %v95 = vld [vmem:[%s3 + $0x28] sm:$0xf]
    %v96 = vld [vmem:[%s3 + $0x2c] sm:$0xf]
    %v97 = vld [vmem:[%s3 + $0x30] sm:$0xf]
    %v98 = vld [vmem:[%s3 + $0x34] sm:$0xf]
    %v99 = vld [vmem:[%s3 + $0x38] sm:$0xf]
    %v100 = vld [vmem:[%s3 + $0x3c] sm:$0xf]
    %v101 = vld [vmem:[%s4] sm:$0x1]
    %v103 = vperm.slane %v101, 0
    %v121 = vunpack.c.l.b16 %v85
    %v122 = vunpack.c.l.b16 %v86
    %v123 = vunpack.c.l.b16 %v87
    %v124 = vunpack.c.l.b16 %v88
    %v125 = vunpack.c.l.b16 %v89
    %v126 = vunpack.c.l.b16 %v90
    %v127 = vunpack.c.l.b16 %v91
    %v128 = vunpack.c.l.b16 %v92
    %v129 = vunpack.c.l.b16 %v93
    %v130 = vunpack.c.l.b16 %v94
    %v131 = vunpack.c.l.b16 %v95
    %v132 = vunpack.c.l.b16 %v96
    %v133 = vunpack.c.l.b16 %v97
    %v134 = vunpack.c.l.b16 %v98
    %v135 = vunpack.c.l.b16 %v99
    %v136 = vunpack.c.l.b16 %v100
    %v137 = vpack.c.b16 %v122, %v121
    %v138 = vpack.c.b16 %v124, %v123
    %v139 = vpack.c.b16 %v126, %v125
    %v140 = vpack.c.b16 %v128, %v127
    %v141 = vpack.c.b16 %v130, %v129
    %v142 = vpack.c.b16 %v132, %v131
    %v143 = vpack.c.b16 %v134, %v133
    %v144 = vpack.c.b16 %v136, %v135
    %153 = vmatpush.bf16.msra.mxu0 %v144
    %154 = vmatpush.bf16.msra.mxu0 %v143
    %155 = vmatpush.bf16.msra.mxu0 %v142
    %156 = vmatpush.bf16.msra.mxu0 %v141
    %157 = vmatpush.bf16.msra.mxu0 %v140
    %158 = vmatpush.bf16.msra.mxu0 %v139
    %159 = vmatpush.bf16.msra.mxu0 %v138
    %160 = vmatpush.bf16.msra.mxu0 %v137
    %161 = vmatmul.bf16.gmra.mxu0 %v84
    %v162 = vpop.f32.mrf.mxu0
    %v163 = vadd.f32 %v103, %v162
    %v164 = vpop.f32.mrf.mxu0
    %165 = vdwg.mxu0
    %v166 = vmax.f32 %v163, 0.0
    %v167 = vpack.c.bf16 %v166, %v166
    %v168 = vld [vmem:[%s5] sm:$0xf]
    %v169 = vld [vmem:[%s5 + $0x4] sm:$0xf]
    %v170 = vld [vmem:[%s5 + $0x8] sm:$0xf]
    %v171 = vld [vmem:[%s5 + $0xc] sm:$0xf]
    %v172 = vld [vmem:[%s5 + $0x10] sm:$0xf]
    %v173 = vld [vmem:[%s5 + $0x14] sm:$0xf]
    %v174 = vld [vmem:[%s5 + $0x18] sm:$0xf]
    %v175 = vld [vmem:[%s5 + $0x1c] sm:$0xf]
    %v176 = vld [vmem:[%s5 + $0x20] sm:$0xf]
    %v177 = vld [vmem:[%s5 + $0x24] sm:$0xf]
    %v178 = vld [vmem:[%s5 + $0x28] sm:$0xf]
    %v179 = vld [vmem:[%s5 + $0x2c] sm:$0xf]
    %v180 = vld [vmem:[%s5 + $0x30] sm:$0xf]
    %v181 = vld [vmem:[%s5 + $0x34] sm:$0xf]
    %v182 = vld [vmem:[%s5 + $0x38] sm:$0xf]
    %v183 = vld [vmem:[%s5 + $0x3c] sm:$0xf]
    %v184 = vld [vmem:[%s6] sm:$0x1]
    %v186 = vperm.slane %v184, 0
    %v204 = vunpack.c.l.b16 %v168
    %v205 = vunpack.c.l.b16 %v169
    %v206 = vunpack.c.l.b16 %v170
    %v207 = vunpack.c.l.b16 %v171
    %v208 = vunpack.c.l.b16 %v172
    %v209 = vunpack.c.l.b16 %v173
    %v210 = vunpack.c.l.b16 %v174
    %v211 = vunpack.c.l.b16 %v175
    %v212 = vunpack.c.l.b16 %v176
    %v213 = vunpack.c.l.b16 %v177
    %v214 = vunpack.c.l.b16 %v178
    %v215 = vunpack.c.l.b16 %v179
    %v216 = vunpack.c.l.b16 %v180
    %v217 = vunpack.c.l.b16 %v181
    %v218 = vunpack.c.l.b16 %v182
    %v219 = vunpack.c.l.b16 %v183
    %v220 = vpack.c.b16 %v205, %v204
    %v221 = vpack.c.b16 %v207, %v206
    %v222 = vpack.c.b16 %v209, %v208
    %v223 = vpack.c.b16 %v211, %v210
    %v224 = vpack.c.b16 %v213, %v212
    %v225 = vpack.c.b16 %v215, %v214
    %v226 = vpack.c.b16 %v217, %v216
    %v227 = vpack.c.b16 %v219, %v218
    %236 = vmatpush.bf16.msra.mxu0 %v227
    %237 = vmatpush.bf16.msra.mxu0 %v226
    %238 = vmatpush.bf16.msra.mxu0 %v225
    %239 = vmatpush.bf16.msra.mxu0 %v224
    %240 = vmatpush.bf16.msra.mxu0 %v223
    %241 = vmatpush.bf16.msra.mxu0 %v222
    %242 = vmatpush.bf16.msra.mxu0 %v221
    %243 = vmatpush.bf16.msra.mxu0 %v220
    %244 = vmatmul.bf16.gmra.mxu0 %v167
    %v245 = vpop.f32.mrf.mxu0
    %v246 = vadd.f32 %v186, %v245
    %v247 = vpop.f32.mrf.mxu0
    %248 = vdwg.mxu0
    %vm249 = vcmask 130048
    %250 = vst.msk [vmem:[#allocation5] sm:$0xff] %vm249, %v246
    // Predicated region
    $region34: #{_mlp_pallas.1} parent=1 // pred_check
      _
    $region35: #{_mlp_pallas.1} parent=1 // pred_check_branch
      %252 = sbr.rel (0) target = $region37
    $region36: #{_mlp_pallas.1} parent=1 // pred_region
      %254 = vsyncadd [#allocation4], 0
      %s256 = sshll.u32 [#allocation5], 4
      %s257 = int_to_ptr.vmem [resolvable:$true] %s256
      %s258 = sshll.u32 %s7, 4
      %s259 = int_to_ptr.hbm [resolvable:$true] %s258
      %261 = dma.vmem_to_hbm [thread:$0]  %s257, 128, %s259, [#allocation4]
    $region37: #{_mlp_pallas.1} parent=1 // pred_fallthru
      _
    // Predicated region
    $region38: #{_mlp_pallas.1} parent=1 // pred_check
      _
    $region39: #{_mlp_pallas.1} parent=1 // pred_check_branch
      %263 = sbr.rel (0) target = $region41
    $region40: #{_mlp_pallas.1} parent=1 // pred_region
      %265 = dma.done [#allocation4], 128
    $region41: #{_mlp_pallas.1} parent=1 // pred_fallthru
      _
    %266 = vsyncpa [#allocation3], 1
    %267 = vsyncpa [#allocation4], 1

</llo_original>
